<compile_context>
chip_gen: v5e
topology: v5e:2x2
jax: 0.10.0
libtpu: 0.0.40
codegen_flags: <defaults>
</compile_context>

<pallas_src>
import functools

import numpy as np
import jax
import jax.numpy as jnp
from jax import lax
from jax.experimental import pallas as pl
from jax.experimental.pallas import tpu as pltpu


# --------------------------------------------------------------------------- #
# Generation-aware VMEM budgeting / tile selection.
# --------------------------------------------------------------------------- #
def _vmem_budget_bytes():
    try:
        cap = int(pltpu.get_tpu_info().vmem_capacity_bytes)
    except Exception:
        cap = 64 << 20                     # conservative fallback (v7x-sized)
    return cap * 3 // 4                    # leave headroom for compiler scratch


def _main_vmem_estimate(tm, n, d, itemsize, emit_sim, resident_bufs):
    f32 = 4
    b = resident_bufs * n * d * itemsize           # resident zn rhs
    b += 2 * 2 * tm * d * itemsize                 # row tile + pair tile, double-buffered
    if emit_sim:
        b += 2 * tm * n * f32                      # logits output slab, double-buffered
    b += 4 * tm * n * f32                          # in-kernel (tm, n) temporaries
    return int(b * 1.4) + (2 << 20)


def _choose_tile(batch, n, d, itemsize, emit_sim, budget, resident_bufs):
    cands = [t for t in range(8, min(batch, 1024) + 1, 8) if batch % t == 0]
    if not cands:
        return n                                   # tiny / odd batch: single tile
    fits = [t for t in cands
            if _main_vmem_estimate(t, n, d, itemsize, emit_sim, resident_bufs) <= budget]
    return max(fits) if fits else min(cands)       # never fall back to a huge tm = n


def _choose_prologue_tile(batch, d, budget=12 << 20):
    cands = [t for t in range(8, batch + 1, 8) if batch % t == 0]
    if not cands:
        return batch
    per_row = 48 * d                               # ~ all prologue buffers per zn row
    fits = [t for t in cands if t * per_row <= budget]
    return max(fits) if fits else min(cands)


# --------------------------------------------------------------------------- #
# Prologue: L2-normalize once (row-tiled), emit zn = [zn_i ; zn_j] in matmul dtype.
# --------------------------------------------------------------------------- #
def _normalize_kernel(zi_ref, zj_ref, zn_ref):
    def _norm(x):
        x = x.astype(jnp.float32)
        sq = jnp.sum(x * x, axis=-1, keepdims=True)
        # f.normalize(dim=-1, eps=1e-12): x * rsqrt(max(||x||^2, 1e-24))
        return x * lax.rsqrt(jnp.maximum(sq, jnp.float32(1e-24)))

    zn_ref[0, :, :] = _norm(zi_ref[...]).astype(zn_ref.dtype)
    zn_ref[1, :, :] = _norm(zj_ref[...]).astype(zn_ref.dtype)


def _normalize(z_i, z_j, out_dtype):
    batch, d = z_i.shape
    tmn = _choose_prologue_tile(batch, d)
    zn3 = pl.pallas_call(
        _normalize_kernel,
        grid=(batch // tmn,),
        out_shape=jax.ShapeDtypeStruct((2, batch, d), out_dtype),
        in_specs=[pl.BlockSpec((tmn, d), lambda i: (i, 0)),
                  pl.BlockSpec((tmn, d), lambda i: (i, 0))],
        out_specs=pl.BlockSpec((2, tmn, d), lambda i: (0, i, 0)),
        compiler_params=pltpu.CompilerParams(dimension_semantics=("parallel",)),
    )(z_i, z_j)
    # (2, B, d) -> (n, d) is a contiguous (free) reshape: rows [zn_i ; zn_j].
    return zn3.reshape(2 * batch, d)


# --------------------------------------------------------------------------- #
# Main kernel: one (tm, n) Gram row-slab + per-tile scalar partial NT-Xent loss.
# --------------------------------------------------------------------------- #
def _ntxent_tile_kernel(*refs, temperature, batch, emit_sim, pair_via_spec):
    if pair_via_spec:
        zt_ref, zp_ref, zall_ref = refs[:3]
        out_refs = refs[3:]
    else:
        zt_ref, zall_ref = refs[:2]
        zp_ref = None
        out_refs = refs[2:]
    if emit_sim:
        sim_ref, loss_ref = out_refs
    else:
        (loss_ref,) = out_refs

    inv_t = jnp.float32(1.0 / temperature)

    zt = zt_ref[...]                    # (tm, d) in matmul dtype (f32 or bf16)
    zall = zall_ref[...]                # (n, d)  grid-invariant rhs, same dtype

    # Gram row-slab on the MXU; rhs "transpose" expressed via contraction dims.
    # TODO(synk): confirm no per-step transpose of zall is materialized by Mosaic.
    sim_tile = lax.dot_general(zt, zall, (((1,), (1,)), ((), ())),
                               preferred_element_type=jnp.float32)   # (tm, n) f32
    logits = sim_tile * inv_t
    if emit_sim:
        sim_ref[...] = logits           # already temperature-scaled: no wrapper pass

    ztf = zt.astype(jnp.float32)        # small (tm, d) casts only; rhs stays untouched
    if pair_via_spec:
        zpf = zp_ref[...].astype(jnp.float32)
    else:
        # Single-tile fallback (tm == n): pair row of r is (r + batch) mod n.
        zpf = jnp.concatenate([ztf[batch:], ztf[:batch]], axis=0)

    # Positive logit: O(tm*d) row-dot against the pair rows (kept in f32).
    pos = jnp.sum(ztf * zpf, axis=-1, keepdims=True) * inv_t          # (tm, 1)

    # Rows are L2-normalized => every logit <= 1/t, so the analytic max m = 1/t keeps
    # every exponent <= ~0 (no per-row max reduce over the (tm, n) slab).
    m = inv_t
    exp_all = jnp.exp(logits - m)                                     # (tm, n)
    row_sum = jnp.sum(exp_all, axis=-1, keepdims=True)                # (tm, 1)
    # Remove the self-similarity (diagonal) term analytically instead of an iota mask;
    # <z_r, z_r> is recomputed in f32 so it also matches the bf16-matmul diagonal.
    # TODO(synk): optional bf16 exp on v6e/v7x (EUP bf16) with f32 row-sum accumulation.
    self_term = jnp.exp(jnp.sum(ztf * ztf, axis=-1, keepdims=True) * inv_t - m)
    lse = m + jnp.log(row_sum - self_term)                            # (tm, 1)

    # One scalar partial loss per tile (SMEM (1,1) block -> no narrow (tm,1) vst slab).
    loss_ref[0, 0] = jnp.sum(lse - pos)


def _call_main(zn, *, temperature, batch, tm, emit_sim, single_buffer_resident):
    n, d = zn.shape
    itemsize = jnp.dtype(zn.dtype).itemsize
    nblocks = n // tm
    pair_via_spec = tm != n

    in_specs = [pl.BlockSpec((tm, d), lambda i: (i, 0))]
    if pair_via_spec:
        shift = batch // tm
        in_specs.append(
            pl.BlockSpec((tm, d), lambda i, s=shift, nb=nblocks: ((i + s) % nb, 0)))
    resident_kwargs = {}
    if single_buffer_resident:
        # The rhs block index never changes -> one buffer is enough (halves its VMEM).
        resident_kwargs["pipeline_mode"] = pl.Buffered(1)
    in_specs.append(pl.BlockSpec((n, d), lambda i: (0, 0), **resident_kwargs))

    loss_shape = jax.ShapeDtypeStruct((nblocks, 1), jnp.float32)
    loss_spec = pl.BlockSpec((1, 1), lambda i: (i, 0),
                             memory_space=pltpu.MemorySpace.SMEM)
    if emit_sim:
        out_shape = (jax.ShapeDtypeStruct((n, n), jnp.float32), loss_shape)
        out_specs = (pl.BlockSpec((tm, n), lambda i: (i, 0)), loss_spec)
    else:
        out_shape = loss_shape
        out_specs = loss_spec

    resident_bufs = 1 if single_buffer_resident else 2
    est = _main_vmem_estimate(tm, n, d, itemsize, emit_sim, resident_bufs)
    vmem_limit = int(min(max(est, 16 << 20), _vmem_budget_bytes()))

    kernel = functools.partial(
        _ntxent_tile_kernel, temperature=float(temperature), batch=batch,
        emit_sim=emit_sim, pair_via_spec=pair_via_spec)

    call = pl.pallas_call(
        kernel,
        grid=(nblocks,),
        out_shape=out_shape,
        in_specs=in_specs,
        out_specs=out_specs,
        compiler_params=pltpu.CompilerParams(
            dimension_semantics=("parallel",),   # no cross-step state: megacore-safe
            vmem_limit_bytes=vmem_limit),
    )
    n_in = 3 if pair_via_spec else 2
    return call(*((zn,) * n_in))


# --------------------------------------------------------------------------- #
# performance_view glue: PyTorch [n, n-1] logits column ordering.
# --------------------------------------------------------------------------- #
def _build_logits_index(batch):
    n = 2 * batch
    ar = np.arange(n)
    pair = (ar + batch) % n
    keep = (ar[None, :] != ar[:, None]) & (ar[None, :] != pair[:, None])
    rest = np.broadcast_to(ar, (n, n))[keep].reshape(n, n - 2)
    idx = np.concatenate([pair[:, None], rest], axis=1).astype(np.int32)
    return jnp.asarray(idx)


# --------------------------------------------------------------------------- #
# Public wrapper.
# --------------------------------------------------------------------------- #
def ntxent_loss(z_i, z_j, temperature, performance_view=True, tm=None,
                use_bf16_matmul=False):
    assert z_i.shape == z_j.shape and z_i.ndim == 2
    batch, d = z_i.shape
    n = 2 * batch

    mat_dtype = jnp.bfloat16 if use_bf16_matmul else jnp.float32
    itemsize = jnp.dtype(mat_dtype).itemsize

    zn = _normalize(z_i, z_j, mat_dtype)

    if tm is None:
        tm = _choose_tile(batch, n, d, itemsize, performance_view,
                          _vmem_budget_bytes(), resident_bufs=1)
    assert tm == n or (batch % tm == 0 and tm % 8 == 0), (batch, tm)

    def _run(single_buffer):
        return _call_main(zn, temperature=temperature, batch=batch, tm=tm,
                          emit_sim=performance_view,
                          single_buffer_resident=single_buffer)

    try:
        outs = _run(True)
    except Exception:
        # Fallback if this jax build rejects pipeline_mode=pl.Buffered(1).
        outs = _run(False)

    if performance_view:
        logits_full, loss_parts = outs
    else:
        loss_parts = outs

    loss = jnp.sum(loss_parts) / jnp.float32(n)
    if not performance_view:
        return loss

    # TODO(synk): the lane-dim take_along_axis gather dominates perf-view cost for large
    # n; replace with structured slices / in-kernel reordering if it matters.
    idx = _build_logits_index(batch)
    logits = jnp.take_along_axis(logits_full, idx, axis=1)
    labels = jnp.zeros((n,), dtype=jnp.int32)   # PyTorch uses int64; int32 under default JAX
    return loss, (labels, logits)


# --------------------------------------------------------------------------- #
# Pure-JAX reference mirroring the PyTorch forward.
# --------------------------------------------------------------------------- #
def _reference_loss(z_i, z_j, temperature):
    b = z_i.shape[0]
    n = 2 * b
    z = jnp.concatenate([z_i, z_j], axis=0).astype(jnp.float32)
    z = z / jnp.maximum(jnp.linalg.norm(z, axis=-1, keepdims=True), 1e-12)
    sim = jnp.dot(z, z.T, precision=jax.lax.Precision.HIGHEST)
    idx = _build_logits_index(b)
    logits = jnp.take_along_axis(sim, idx, axis=1) / temperature
    lse = jax.nn.logsumexp(logits, axis=-1)
    loss = jnp.sum(lse - logits[:, 0]) / n
    return loss, logits


if __name__ == "__main__":
    temperature = 0.5
    key = jax.random.PRNGKey(0)
    k1, k2, k3, k4 = jax.random.split(key, 4)

    # Case 1: small (B=8, D=32) -> grid=(2,), pair tile via shifted BlockSpec,
    # full performance_view outputs.
    zi_s = jax.random.normal(k1, (8, 32), dtype=jnp.float32)
    zj_s = jax.random.normal(k2, (8, 32), dtype=jnp.float32)
    loss1, (labels1, logits1) = ntxent_loss(zi_s, zj_s, temperature, performance_view=True)
    loss1 = jax.block_until_ready(loss1)
    logits1 = jax.block_until_ready(logits1)
    ref1, ref_logits1 = _reference_loss(zi_s, zj_s, temperature)
    assert labels1.shape == (16,) and logits1.shape == (16, 15)
    np.testing.assert_allclose(np.asarray(loss1), np.asarray(ref1), rtol=1e-5, atol=1e-5)
    np.testing.assert_allclose(np.asarray(logits1), np.asarray(ref_logits1),
                               rtol=1e-4, atol=1e-4)

    # Case 2: multi-tile grid (B=64, D=128, tm=32 -> grid=(4,)), loss-only fast path
    # (no O(n^2) HBM writeback, scalar partial sums only).
    zi_l = jax.random.normal(k3, (64, 128), dtype=jnp.float32)
    zj_l = jax.random.normal(k4, (64, 128), dtype=jnp.float32)
    loss2 = ntxent_loss(zi_l, zj_l, temperature, performance_view=False, tm=32)
    loss2 = jax.block_until_ready(loss2)
    ref2, _ = _reference_loss(zi_l, zj_l, temperature)
    np.testing.assert_allclose(np.asarray(loss2), np.asarray(ref2), rtol=1e-5, atol=1e-5)

    # Case 3: bf16 resident rhs + bf16 MXU path with performance_view (loose tolerance).
    loss3, (labels3, logits3) = ntxent_loss(zi_l, zj_l, temperature, performance_view=True,
                                            tm=64, use_bf16_matmul=True)
    loss3 = jax.block_until_ready(loss3)
    assert logits3.shape == (128, 127) and labels3.shape == (128,)
    ref3, _ = _reference_loss(zi_l, zj_l, temperature)
    np.testing.assert_allclose(np.asarray(loss3), np.asarray(ref3), rtol=0.0, atol=3e-2)

    print("KERNEL_OK")
</pallas_src>

<mosaic_0001>
module attributes {stable_mosaic.version = 11 : i64} {
  func.func @_normalize_kernel(%arg0: i32, %arg1: memref<8x32xf32, #tpu.memory_space<vmem>>, %arg2: memref<8x32xf32, #tpu.memory_space<vmem>>, %arg3: memref<2x8x32xf32, #tpu.memory_space<vmem>>) attributes {dimension_semantics = [#tpu.dimension_semantics<parallel>], iteration_bounds = array<i64: 1>, scalar_prefetch = 0 : i64, scratch_operands = 0 : i64, tpu.core_type = #tpu.core_type<tc>, window_params = [{transform_indices = @transform_0, window_bounds = array<i64: 8, 32>}, {transform_indices = @transform_1, window_bounds = array<i64: 8, 32>}, {transform_indices = @transform_2, window_bounds = array<i64: 2, 8, 32>}]} {
    %c0 = arith.constant 0 : index
    %c0_0 = arith.constant 0 : index
    %0 = vector.load %arg1[%c0, %c0_0] : memref<8x32xf32, #tpu.memory_space<vmem>>, vector<8x32xf32>
    %1 = arith.mulf %0, %0 : vector<8x32xf32>
    %cst = arith.constant dense<0.000000e+00> : vector<8xf32>
    %2 = vector.multi_reduction <add>, %1, %cst [1] : vector<8x32xf32> to vector<8xf32>
    %3 = vector.shape_cast %2 : vector<8xf32> to vector<8x1xf32>
    %cst_1 = arith.constant 1.000000e-24 : f32
    %4 = vector.broadcast %cst_1 : f32 to vector<8x1xf32>
    %5 = arith.maximumf %3, %4 : vector<8x1xf32>
    %6 = math.rsqrt %5 : vector<8x1xf32>
    %7 = vector.broadcast %6 : vector<8x1xf32> to vector<8x32xf32>
    %8 = arith.mulf %0, %7 : vector<8x32xf32>
    %c0_2 = arith.constant 0 : index
    %c0_3 = arith.constant 0 : index
    %c0_4 = arith.constant 0 : index
    %9 = vector.load %arg3[%c0_2, %c0_3, %c0_4] : memref<2x8x32xf32, #tpu.memory_space<vmem>>, vector<1x8x32xf32>
    %10 = vector.shape_cast %9 : vector<1x8x32xf32> to vector<8x32xf32>
    %11 = vector.shape_cast %8 : vector<8x32xf32> to vector<1x8x32xf32>
    tpu.vector_store %arg3[%c0_2, %c0_3, %c0_4], %11 {strides = array<i32>} : memref<2x8x32xf32, #tpu.memory_space<vmem>>, vector<1x8x32xf32>,
    %c0_5 = arith.constant 0 : index
    %c0_6 = arith.constant 0 : index
    %12 = vector.load %arg2[%c0_5, %c0_6] : memref<8x32xf32, #tpu.memory_space<vmem>>, vector<8x32xf32>
    %13 = arith.mulf %12, %12 : vector<8x32xf32>
    %cst_7 = arith.constant dense<0.000000e+00> : vector<8xf32>
    %14 = vector.multi_reduction <add>, %13, %cst_7 [1] : vector<8x32xf32> to vector<8xf32>
    %15 = vector.shape_cast %14 : vector<8xf32> to vector<8x1xf32>
    %cst_8 = arith.constant 1.000000e-24 : f32
    %16 = vector.broadcast %cst_8 : f32 to vector<8x1xf32>
    %17 = arith.maximumf %15, %16 : vector<8x1xf32>
    %18 = math.rsqrt %17 : vector<8x1xf32>
    %19 = vector.broadcast %18 : vector<8x1xf32> to vector<8x32xf32>
    %20 = arith.mulf %12, %19 : vector<8x32xf32>
    %c1 = arith.constant 1 : index
    %c0_9 = arith.constant 0 : index
    %c0_10 = arith.constant 0 : index
    %21 = vector.load %arg3[%c1, %c0_9, %c0_10] : memref<2x8x32xf32, #tpu.memory_space<vmem>>, vector<1x8x32xf32>
    %22 = vector.shape_cast %21 : vector<1x8x32xf32> to vector<8x32xf32>
    %23 = vector.shape_cast %20 : vector<8x32xf32> to vector<1x8x32xf32>
    tpu.vector_store %arg3[%c1, %c0_9, %c0_10], %23 {strides = array<i32>} : memref<2x8x32xf32, #tpu.memory_space<vmem>>, vector<1x8x32xf32>,
    return
  }
  func.func @transform_0(%arg0: i32) -> (i32, i32) {
    %c0_i32 = arith.constant 0 : i32
    %c0_i32_0 = arith.constant 0 : i32
    return %arg0, %c0_i32 : i32, i32
  }
  func.func @transform_1(%arg0: i32) -> (i32, i32) {
    %c0_i32 = arith.constant 0 : i32
    %c0_i32_0 = arith.constant 0 : i32
    return %arg0, %c0_i32 : i32, i32
  }
  func.func @transform_2(%arg0: i32) -> (i32, i32, i32) {
    %c0_i32 = arith.constant 0 : i32
    %c0_i32_0 = arith.constant 0 : i32
    %c0_i32_1 = arith.constant 0 : i32
    return %c0_i32, %arg0, %c0_i32_0 : i32, i32, i32
  }
}

</mosaic_0001>

<llo_original>
// kernel: tpu_custom_call.1
$region0: #{tpu_custom_call.1}
  #allocation0 [shape = 'u32[]', space=smem, size = 0x4, offset = 0x4, fixed_abs, tag = 'smem constant byte address 0x4 - core index']
  #allocation1 [shape = 'u32[72,128]{1,0:T(1,128)}', space=vmem, size = 0x9000, scoped, tag = 'internal scratch']
  %s0 = inlined_call_operand.hbm [shape: f32[8,32], index: 0, kind: input, shape index: {}]
  %s1 = inlined_call_operand.hbm [shape: f32[8,32], index: 1, kind: input, shape index: {}]
  %s2 = inlined_call_operand.hbm [shape: f32[2,8,32], index: 2, kind: output, shape index: {}]
  %s3 = sld [smem:[#allocation0]]
  $region26: #{tpu_custom_call.1} parent=0
    _
  %s5 = ssub.s32 1, %s3
  %s6 = scalar_select 0, %s5, %s3
  $region1: #{tpu_custom_call.1} parent=0
    #allocation2 [shape = 'u8[4096]{0}', space=vmem, size = 0x1000, scoped, tag = 'input window, operand 0, single buffered']
    #allocation3 [shape = 's32[1]{0}', space=sflag, size = 0x4, scoped, tag = 'scoped memory for tpu_custom_call.1']
    #allocation4 [shape = 's32[1]{0}', space=sflag, size = 0x4, scoped, tag = 'scoped memory for tpu_custom_call.1']
    #allocation5 [shape = 'u8[4096]{0}', space=vmem, size = 0x1000, scoped, tag = 'input window, operand 1, single buffered']
    #allocation6 [shape = 's32[1]{0}', space=sflag, size = 0x4, scoped, tag = 'scoped memory for tpu_custom_call.1']
    #allocation7 [shape = 'u8[8192]{0}', space=vmem, size = 0x2000, scoped, tag = 'output window, operand 0, single buffered']
    %7 = vsyncpa [#allocation3], 0
    %8 = vsyncpa [#allocation6], 0
    %9 = vsyncpa [#allocation4], 0
    // Predicated region
    $region2: #{tpu_custom_call.1} parent=1 // pred_check
      _
    $region3: #{tpu_custom_call.1} parent=1 // pred_check_branch
      %11 = sbr.rel (0) target = $region5
    $region4: #{tpu_custom_call.1} parent=1 // pred_region
      %13 = vsyncadd [#allocation3], 0
      %s15 = sshll.u32 %s0, 4
      %s16 = int_to_ptr.hbm [resolvable:$true] %s15
      %s17 = sshll.u32 [#allocation2], 4
      %s18 = int_to_ptr.vmem [resolvable:$true] %s17
      %20 = dma.hbm_to_vmem [thread:$0]  %s16, 128, %s18, [#allocation3]
    $region5: #{tpu_custom_call.1} parent=1 // pred_fallthru
      _
    // Predicated region
    $region6: #{tpu_custom_call.1} parent=1 // pred_check
      _
    $region7: #{tpu_custom_call.1} parent=1 // pred_check_branch
      %22 = sbr.rel (0) target = $region9
    $region8: #{tpu_custom_call.1} parent=1 // pred_region
      %24 = vsyncadd [#allocation6], 0
      %s26 = sshll.u32 %s1, 4
      %s27 = int_to_ptr.hbm [resolvable:$true] %s26
      %s28 = sshll.u32 [#allocation5], 4
      %s29 = int_to_ptr.vmem [resolvable:$true] %s28
      %31 = dma.hbm_to_vmem [thread:$0]  %s27, 128, %s29, [#allocation6]
    $region9: #{tpu_custom_call.1} parent=1 // pred_fallthru
      _
    // Predicated region
    $region10: #{tpu_custom_call.1} parent=1 // pred_check
      _
    $region11: #{tpu_custom_call.1} parent=1 // pred_check_branch
      %33 = sbr.rel (0) target = $region13
    $region12: #{tpu_custom_call.1} parent=1 // pred_region
      %35 = dma.done [#allocation3], 128
    $region13: #{tpu_custom_call.1} parent=1 // pred_fallthru
      _
    // Predicated region
    $region14: #{tpu_custom_call.1} parent=1 // pred_check
      _
    $region15: #{tpu_custom_call.1} parent=1 // pred_check_branch
      %37 = sbr.rel (0) target = $region17
    $region16: #{tpu_custom_call.1} parent=1 // pred_region
      %39 = dma.done [#allocation6], 128
    $region17: #{tpu_custom_call.1} parent=1 // pred_fallthru
      _
    %v40 = vld [vmem:[#allocation2] sm:$0xff]
    %v41 = vmul.f32 %v40, %v40
    %vm42 = vcmask 261120
    %v43 = vsel %vm42, %v41, 0.0
    %44 = vadd.xlane.f32.xlu0 %v43
    %v45 = vpop.xlane.xlu0 %44
    %v46 = vmax.f32 %v45, 1e-24
    %v47 = vrsqrt.pop %v46
    %v48 = vmul.f32 %v47, %v46
    %v49 = vmul.f32 %v48, %v47
    %v50 = vmul.f32 0.5, %v49
    %v51 = vsub.f32 1.5, %v50
    %v52 = vmul.f32 %v47, %v51
    %vm53 = vweird.f32 %v46
    %vm54 = vweird.f32 %v47
    %vm55 = vmor %vm53, %vm54
    %v56 = vsel %vm55, %v47, %v52
    %v57 = vmul.f32 %v40, %v56
    %58 = vst.msk [vmem:[#allocation7] sm:$0xff] %vm42, %v57
    %v59 = vld [vmem:[#allocation5] sm:$0xff]
    %v60 = vmul.f32 %v59, %v59
    %v61 = vsel %vm42, %v60, 0.0
    %62 = vadd.xlane.f32.xlu0 %v61
    %v63 = vpop.xlane.xlu0 %62
    %v64 = vmax.f32 %v63, 1e-24
    %v65 = vrsqrt.pop %v64
    %v66 = vmul.f32 %v65, %v64
    %v67 = vmul.f32 %v66, %v65
    %v68 = vmul.f32 0.5, %v67
    %v69 = vsub.f32 1.5, %v68
    %v70 = vmul.f32 %v65, %v69
    %vm71 = vweird.f32 %v64
    %vm72 = vweird.f32 %v65
    %vm73 = vmor %vm71, %vm72
    %v74 = vsel %vm73, %v65, %v70
    %v75 = vmul.f32 %v59, %v74
    %s76 = scalar_lea.vmem [#allocation7], 8
    %77 = vst.msk [vmem:[%s76] sm:$0xff] %vm42, %v75
    // Predicated region
    $region18: #{tpu_custom_call.1} parent=1 // pred_check
      _
    $region19: #{tpu_custom_call.1} parent=1 // pred_check_branch
      %79 = sbr.rel (0) target = $region21
    $region20: #{tpu_custom_call.1} parent=1 // pred_region
      %81 = vsyncadd [#allocation4], 0
      %s82 = sshll.u32 [#allocation7], 4
      %s83 = int_to_ptr.vmem [resolvable:$true] %s82
      %s84 = sshll.u32 %s2, 4
      %s85 = int_to_ptr.hbm [resolvable:$true] %s84
      %90 = dma.vmem_to_hbm [thread:$0]  %s83, 256, %s85, [#allocation4], 128, 128, 8
    $region21: #{tpu_custom_call.1} parent=1 // pred_fallthru
      _
    // Predicated region
    $region22: #{tpu_custom_call.1} parent=1 // pred_check
      _
    $region23: #{tpu_custom_call.1} parent=1 // pred_check_branch
      %92 = sbr.rel (0) target = $region25
    $region24: #{tpu_custom_call.1} parent=1 // pred_region
      %94 = dma.done [#allocation4], 256
    $region25: #{tpu_custom_call.1} parent=1 // pred_fallthru
      _
    %95 = vsyncpa [#allocation3], 1
    %96 = vsyncpa [#allocation6], 1
    %97 = vsyncpa [#allocation4], 1

</llo_original>
